<compile_context>
chip_gen: v6e
topology: v6e:2x2x1
jax: 0.10.0
libtpu: 0.0.40
codegen_flags: <defaults>
</compile_context>

<pallas_src>
import functools

import jax
import jax.numpy as jnp
from jax.experimental import pallas as pl
from jax.experimental.pallas import tpu as pltpu


def _gemma2b_kernel(x_ref, w1_ref, b1_ref, w2_ref, b2_ref,
                    w3_ref, b3_ref, w4_ref, b4_ref, out_ref):
    # Load the batch tile (bf16) and the biases (f32) once; reuse below.
    x = x_ref[...]
    b1 = b1_ref[...]
    b2 = b2_ref[...]
    b3 = b3_ref[...]
    b4 = b4_ref[...]

    # Encoder: Linear(num_genes -> hidden) + ReLU   (bf16 MXU, f32 accumulate)
    h1 = jnp.dot(x, w1_ref[...], preferred_element_type=jnp.float32)
    h1 = jnp.maximum(h1 + b1, 0.0).astype(jnp.bfloat16)

    # Encoder: Linear(hidden -> latent)
    z = jnp.dot(h1, w2_ref[...], preferred_element_type=jnp.float32) + b2
    z = z.astype(jnp.bfloat16)

    # Decoder: Linear(latent -> hidden) + ReLU
    h2 = jnp.dot(z, w3_ref[...], preferred_element_type=jnp.float32)
    h2 = jnp.maximum(h2 + b3, 0.0).astype(jnp.bfloat16)

    # Decoder: Linear(hidden -> num_genes)
    x_hat = jnp.dot(h2, w4_ref[...], preferred_element_type=jnp.float32) + b4
    out_ref[...] = x_hat.astype(out_ref.dtype)


def _round_up(x, m):
    return (x + m - 1) // m * m


@functools.partial(jax.jit, static_argnames=("tile_b", "vmem_limit_bytes"))
def gemma2b_forward(x, params, tile_b=128, vmem_limit_bytes=64 * 1024 * 1024):
    """Fused autoencoder forward. x: [B, num_genes] float32 -> [B, num_genes] float32."""
    w1, b1, w2, b2, w3, b3, w4, b4 = params
    B, G = x.shape
    H = w1.shape[1]
    L = w2.shape[1]

    # Lane-dense (128-multiple) feature dims; 16-multiple batch tile for bf16.
    Gp = _round_up(G, 128)
    Hp = _round_up(H, 128)
    Lp = _round_up(L, 128)
    tb = min(_round_up(tile_b, 16), _round_up(B, 16))
    Bp = _round_up(B, tb)

    def pad2(a, r, c):
        return jnp.pad(a, ((0, r - a.shape[0]), (0, c - a.shape[1])))

    # Zero-pad (padding contributes exactly zero to the math) and cast the
    # matmul operands to bf16; biases stay f32.
    xb = pad2(x, Bp, Gp).astype(jnp.bfloat16)
    w1p = pad2(w1, Gp, Hp).astype(jnp.bfloat16)
    b1p = pad2(b1, 1, Hp).astype(jnp.float32)
    w2p = pad2(w2, Hp, Lp).astype(jnp.bfloat16)
    b2p = pad2(b2, 1, Lp).astype(jnp.float32)
    w3p = pad2(w3, Lp, Hp).astype(jnp.bfloat16)
    b3p = pad2(b3, 1, Hp).astype(jnp.float32)
    w4p = pad2(w4, Hp, Gp).astype(jnp.bfloat16)
    b4p = pad2(b4, 1, Gp).astype(jnp.float32)

    grid = (Bp // tb,)

    def resident(shape):
        # Whole-array block, same block index for every grid step (weights /
        # biases stay pinned in VMEM; no re-DMA between steps).
        n = len(shape)
        return pl.BlockSpec(shape, lambda i, _n=n: (0,) * _n)

    flops = 2 * Bp * (Gp * Hp + Hp * Lp + Lp * Hp + Hp * Gp)
    bytes_accessed = (
        xb.size * 2
        + (w1p.size + w2p.size + w3p.size + w4p.size) * 2
        + (b1p.size + b2p.size + b3p.size + b4p.size) * 4
        + Bp * Gp * 4
    )

    out = pl.pallas_call(
        _gemma2b_kernel,
        out_shape=jax.ShapeDtypeStruct((Bp, Gp), jnp.float32),
        grid_spec=pltpu.PrefetchScalarGridSpec(
            num_scalar_prefetch=0,
            grid=grid,
            in_specs=[
                pl.BlockSpec((tb, Gp), lambda i: (i, 0)),   # X batch tile
                resident((Gp, Hp)), resident((1, Hp)),      # enc L1
                resident((Hp, Lp)), resident((1, Lp)),      # enc L2
                resident((Lp, Hp)), resident((1, Hp)),      # dec L1
                resident((Hp, Gp)), resident((1, Gp)),      # dec L2
            ],
            out_specs=pl.BlockSpec((tb, Gp), lambda i: (i, 0)),
        ),
        compiler_params=pltpu.CompilerParams(
            dimension_semantics=("parallel",),
            vmem_limit_bytes=vmem_limit_bytes,
        ),
        cost_estimate=pl.CostEstimate(
            flops=flops, transcendentals=0, bytes_accessed=bytes_accessed),
    )(xb, w1p, b1p, w2p, b2p, w3p, b3p, w4p, b4p)

    # Slice the zero-padded rows/columns back off.
    return out[:B, :G]


def init_params(key, num_genes, hidden_dim, latent_dim):
    """Deterministic synthetic parameters (transposed-Linear layout, f32)."""
    ks = jax.random.split(key, 8)

    def lin(kw, kb, fan_in, fan_out):
        bound = 1.0 / jnp.sqrt(fan_in)
        w = jax.random.uniform(kw, (fan_in, fan_out), jnp.float32, -bound, bound)
        b = jax.random.uniform(kb, (1, fan_out), jnp.float32, -bound, bound)
        return w, b

    w1, b1 = lin(ks[0], ks[1], num_genes, hidden_dim)
    w2, b2 = lin(ks[2], ks[3], hidden_dim, latent_dim)
    w3, b3 = lin(ks[4], ks[5], latent_dim, hidden_dim)
    w4, b4 = lin(ks[6], ks[7], hidden_dim, num_genes)
    return (w1, b1, w2, b2, w3, b3, w4, b4)


def reference_forward(x, params):
    """Pure-JAX reference mirroring the kernel's bf16-operand / f32-accumulate path."""
    w1, b1, w2, b2, w3, b3, w4, b4 = params

    def bf(a):
        return a.astype(jnp.bfloat16).astype(jnp.float32)

    h1 = jnp.maximum(bf(x) @ bf(w1) + b1, 0.0)
    z = bf(h1) @ bf(w2) + b2
    h2 = jnp.maximum(bf(z) @ bf(w3) + b3, 0.0)
    return bf(h2) @ bf(w4) + b4


if __name__ == "__main__":
    # Small shapes consistent with the module defaults:
    # GEMMA2B(num_genes, num_samples, latent_dim=128, hidden_dim=256);
    # forward input X is [num_samples, num_genes].
    num_genes, num_samples = 200, 64
    latent_dim, hidden_dim = 128, 256

    key = jax.random.PRNGKey(0)
    k_x, k_p = jax.random.split(key)
    x = jax.random.normal(k_x, (num_samples, num_genes), jnp.float32)
    params = init_params(k_p, num_genes, hidden_dim, latent_dim)

    out = gemma2b_forward(x, params)
    out = jax.block_until_ready(out)

    ref = reference_forward(x, params)
    assert out.shape == (num_samples, num_genes)
    assert jnp.allclose(out, ref, atol=2e-2, rtol=2e-2), "mismatch vs reference"

    print("KERNEL_OK")
</pallas_src>

<mosaic_0001>
module attributes {stable_mosaic.version = 11 : i64} {
  func.func @_gemma2b_kernel(%arg0: i32, %arg1: memref<64x256xbf16, #tpu.memory_space<vmem>>, %arg2: memref<256x256xbf16, #tpu.memory_space<vmem>>, %arg3: memref<1x256xf32, #tpu.memory_space<vmem>>, %arg4: memref<256x128xbf16, #tpu.memory_space<vmem>>, %arg5: memref<1x128xf32, #tpu.memory_space<vmem>>, %arg6: memref<128x256xbf16, #tpu.memory_space<vmem>>, %arg7: memref<1x256xf32, #tpu.memory_space<vmem>>, %arg8: memref<256x256xbf16, #tpu.memory_space<vmem>>, %arg9: memref<1x256xf32, #tpu.memory_space<vmem>>, %arg10: memref<64x256xf32, #tpu.memory_space<vmem>>) attributes {dimension_semantics = [#tpu.dimension_semantics<parallel>], iteration_bounds = array<i64: 1>, scalar_prefetch = 0 : i64, scratch_operands = 0 : i64, tpu.core_type = #tpu.core_type<tc>, window_params = [{transform_indices = @transform_0, window_bounds = array<i64: 64, 256>}, {pipeline_mode = #tpu.pipeline_mode<synchronous>, transform_indices = @transform_1, window_bounds = array<i64: 256, 256>}, {pipeline_mode = #tpu.pipeline_mode<synchronous>, transform_indices = @transform_2, window_bounds = array<i64: 1, 256>}, {pipeline_mode = #tpu.pipeline_mode<synchronous>, transform_indices = @transform_3, window_bounds = array<i64: 256, 128>}, {pipeline_mode = #tpu.pipeline_mode<synchronous>, transform_indices = @transform_4, window_bounds = array<i64: 1, 128>}, {pipeline_mode = #tpu.pipeline_mode<synchronous>, transform_indices = @transform_5, window_bounds = array<i64: 128, 256>}, {pipeline_mode = #tpu.pipeline_mode<synchronous>, transform_indices = @transform_6, window_bounds = array<i64: 1, 256>}, {pipeline_mode = #tpu.pipeline_mode<synchronous>, transform_indices = @transform_7, window_bounds = array<i64: 256, 256>}, {pipeline_mode = #tpu.pipeline_mode<synchronous>, transform_indices = @transform_8, window_bounds = array<i64: 1, 256>}, {transform_indices = @transform_9, window_bounds = array<i64: 64, 256>}]} {
    %c0 = arith.constant 0 : index
    %c0_0 = arith.constant 0 : index
    %0 = vector.load %arg1[%c0, %c0_0] : memref<64x256xbf16, #tpu.memory_space<vmem>>, vector<64x256xbf16>
    %c0_1 = arith.constant 0 : index
    %c0_2 = arith.constant 0 : index
    %1 = vector.load %arg3[%c0_1, %c0_2] : memref<1x256xf32, #tpu.memory_space<vmem>>, vector<1x256xf32>
    %c0_3 = arith.constant 0 : index
    %c0_4 = arith.constant 0 : index
    %2 = vector.load %arg5[%c0_3, %c0_4] : memref<1x128xf32, #tpu.memory_space<vmem>>, vector<1x128xf32>
    %c0_5 = arith.constant 0 : index
    %c0_6 = arith.constant 0 : index
    %3 = vector.load %arg7[%c0_5, %c0_6] : memref<1x256xf32, #tpu.memory_space<vmem>>, vector<1x256xf32>
    %c0_7 = arith.constant 0 : index
    %c0_8 = arith.constant 0 : index
    %4 = vector.load %arg9[%c0_7, %c0_8] : memref<1x256xf32, #tpu.memory_space<vmem>>, vector<1x256xf32>
    %c0_9 = arith.constant 0 : index
    %c0_10 = arith.constant 0 : index
    %5 = vector.load %arg2[%c0_9, %c0_10] : memref<256x256xbf16, #tpu.memory_space<vmem>>, vector<256x256xbf16>
    %cst = arith.constant dense<0.000000e+00> : vector<64x256xf32>
    %6 = tpu.matmul %0, %5, %cst {dimension_numbers = #tpu.dot_dimension_numbers<[1], [0], [0], [1], [0, 0, 1, 1], [], []>} : vector<64x256xbf16>, vector<256x256xbf16>, vector<64x256xf32> -> vector<64x256xf32>
    %7 = vector.broadcast %1 : vector<1x256xf32> to vector<64x256xf32>
    %8 = arith.addf %6, %7 : vector<64x256xf32>
    %cst_11 = arith.constant 0.000000e+00 : f32
    %9 = vector.broadcast %cst_11 : f32 to vector<64x256xf32>
    %10 = arith.maximumf %8, %9 : vector<64x256xf32>
    %11 = arith.truncf %10 : vector<64x256xf32> to vector<64x256xbf16>
    %c0_12 = arith.constant 0 : index
    %c0_13 = arith.constant 0 : index
    %12 = vector.load %arg4[%c0_12, %c0_13] : memref<256x128xbf16, #tpu.memory_space<vmem>>, vector<256x128xbf16>
    %cst_14 = arith.constant dense<0.000000e+00> : vector<64x128xf32>
    %13 = tpu.matmul %11, %12, %cst_14 {dimension_numbers = #tpu.dot_dimension_numbers<[1], [0], [0], [1], [0, 0, 1, 1], [], []>} : vector<64x256xbf16>, vector<256x128xbf16>, vector<64x128xf32> -> vector<64x128xf32>
    %14 = vector.broadcast %2 : vector<1x128xf32> to vector<64x128xf32>
    %15 = arith.addf %13, %14 : vector<64x128xf32>
    %16 = arith.truncf %15 : vector<64x128xf32> to vector<64x128xbf16>
    %c0_15 = arith.constant 0 : index
    %c0_16 = arith.constant 0 : index
    %17 = vector.load %arg6[%c0_15, %c0_16] : memref<128x256xbf16, #tpu.memory_space<vmem>>, vector<128x256xbf16>
    %cst_17 = arith.constant dense<0.000000e+00> : vector<64x256xf32>
    %18 = tpu.matmul %16, %17, %cst_17 {dimension_numbers = #tpu.dot_dimension_numbers<[1], [0], [0], [1], [0, 0, 1, 1], [], []>} : vector<64x128xbf16>, vector<128x256xbf16>, vector<64x256xf32> -> vector<64x256xf32>
    %19 = vector.broadcast %3 : vector<1x256xf32> to vector<64x256xf32>
    %20 = arith.addf %18, %19 : vector<64x256xf32>
    %cst_18 = arith.constant 0.000000e+00 : f32
    %21 = vector.broadcast %cst_18 : f32 to vector<64x256xf32>
    %22 = arith.maximumf %20, %21 : vector<64x256xf32>
    %23 = arith.truncf %22 : vector<64x256xf32> to vector<64x256xbf16>
    %c0_19 = arith.constant 0 : index
    %c0_20 = arith.constant 0 : index
    %24 = vector.load %arg8[%c0_19, %c0_20] : memref<256x256xbf16, #tpu.memory_space<vmem>>, vector<256x256xbf16>
    %cst_21 = arith.constant dense<0.000000e+00> : vector<64x256xf32>
    %25 = tpu.matmul %23, %24, %cst_21 {dimension_numbers = #tpu.dot_dimension_numbers<[1], [0], [0], [1], [0, 0, 1, 1], [], []>} : vector<64x256xbf16>, vector<256x256xbf16>, vector<64x256xf32> -> vector<64x256xf32>
    %26 = vector.broadcast %4 : vector<1x256xf32> to vector<64x256xf32>
    %27 = arith.addf %25, %26 : vector<64x256xf32>
    %c0_22 = arith.constant 0 : index
    %c0_23 = arith.constant 0 : index
    %28 = vector.load %arg10[%c0_22, %c0_23] : memref<64x256xf32, #tpu.memory_space<vmem>>, vector<64x256xf32>
    tpu.vector_store %arg10[%c0_22, %c0_23], %27 {strides = array<i32>} : memref<64x256xf32, #tpu.memory_space<vmem>>, vector<64x256xf32>,
    return
  }
  func.func @transform_0(%arg0: i32) -> (i32, i32) {
    %c0_i32 = arith.constant 0 : i32
    %c0_i32_0 = arith.constant 0 : i32
    return %arg0, %c0_i32 : i32, i32
  }
  func.func @transform_1(%arg0: i32) -> (i32, i32) {
    %c0_i32 = arith.constant 0 : i32
    %c0_i32_0 = arith.constant 0 : i32
    %c0_i32_1 = arith.constant 0 : i32
    return %c0_i32, %c0_i32_0 : i32, i32
  }
  func.func @transform_2(%arg0: i32) -> (i32, i32) {
    %c0_i32 = arith.constant 0 : i32
    %c0_i32_0 = arith.constant 0 : i32
    %c0_i32_1 = arith.constant 0 : i32
    return %c0_i32, %c0_i32_0 : i32, i32
  }
  func.func @transform_3(%arg0: i32) -> (i32, i32) {
    %c0_i32 = arith.constant 0 : i32
    %c0_i32_0 = arith.constant 0 : i32
    %c0_i32_1 = arith.constant 0 : i32
    return %c0_i32, %c0_i32_0 : i32, i32
  }
  func.func @transform_4(%arg0: i32) -> (i32, i32) {
    %c0_i32 = arith.constant 0 : i32
    %c0_i32_0 = arith.constant 0 : i32
    %c0_i32_1 = arith.constant 0 : i32
    return %c0_i32, %c0_i32_0 : i32, i32
  }
  func.func @transform_5(%arg0: i32) -> (i32, i32) {
    %c0_i32 = arith.constant 0 : i32
    %c0_i32_0 = arith.constant 0 : i32
    %c0_i32_1 = arith.constant 0 : i32
    return %c0_i32, %c0_i32_0 : i32, i32
  }
  func.func @transform_6(%arg0: i32) -> (i32, i32) {
    %c0_i32 = arith.constant 0 : i32
    %c0_i32_0 = arith.constant 0 : i32
    %c0_i32_1 = arith.constant 0 : i32
    return %c0_i32, %c0_i32_0 : i32, i32
  }
  func.func @transform_7(%arg0: i32) -> (i32, i32) {
    %c0_i32 = arith.constant 0 : i32
    %c0_i32_0 = arith.constant 0 : i32
    %c0_i32_1 = arith.constant 0 : i32
    return %c0_i32, %c0_i32_0 : i32, i32
  }
  func.func @transform_8(%arg0: i32) -> (i32, i32) {
    %c0_i32 = arith.constant 0 : i32
    %c0_i32_0 = arith.constant 0 : i32
    %c0_i32_1 = arith.constant 0 : i32
    return %c0_i32, %c0_i32_0 : i32, i32
  }
  func.func @transform_9(%arg0: i32) -> (i32, i32) {
    %c0_i32 = arith.constant 0 : i32
    %c0_i32_0 = arith.constant 0 : i32
    return %arg0, %c0_i32 : i32, i32
  }
}

</mosaic_0001>

<llo_original>
// kernel: gemma2b_forward.1
$region0: #{gemma2b_forward.1}
  #allocation0 [shape = 'u32[]', space=smem, size = 0x4, offset = 0x4, fixed_abs, tag = 'smem constant byte address 0x4 - core index']
  #allocation1 [shape = 'u32[144,128]{1,0:T(1,128)}', space=vmem, size = 0x12000, scoped, tag = 'internal scratch']
  %s0 = inlined_call_operand.vmem [shape: bf16[64,256], index: 0, kind: input, shape index: {}]
  %s1 = inlined_call_operand.vmem [shape: bf16[256,256], index: 1, kind: input, shape index: {}]
  %s2 = inlined_call_operand.vmem [shape: f32[1,256], index: 2, kind: input, shape index: {}]
  %s3 = inlined_call_operand.vmem [shape: bf16[256,128], index: 3, kind: input, shape index: {}]
  %s4 = inlined_call_operand.vmem [shape: f32[1,128], index: 4, kind: input, shape index: {}]
  %s5 = inlined_call_operand.vmem [shape: bf16[128,256], index: 5, kind: input, shape index: {}]
  %s6 = inlined_call_operand.vmem [shape: f32[1,256], index: 6, kind: input, shape index: {}]
  %s7 = inlined_call_operand.vmem [shape: bf16[256,256], index: 7, kind: input, shape index: {}]
  %s8 = inlined_call_operand.vmem [shape: f32[1,256], index: 8, kind: input, shape index: {}]
  %s9 = inlined_call_operand.hbm [shape: f32[64,256], index: 9, kind: output, shape index: {}]
  %s10 = sld [smem:[#allocation0]]
  $region46: #{gemma2b_forward.1} parent=0
    _
  %s12 = ssub.s32 1, %s10
  %s13 = scalar_select 0, %s12, %s10
  $region1: #{gemma2b_forward.1} parent=0
    #allocation2 [shape = 'u8[65536]{0}', space=vmem, size = 0x10000, scoped, tag = 'output window, operand 0, single buffered']
    #allocation3 [shape = 's32[1]{0}', space=sflag, size = 0x4, scoped, tag = 'scoped memory for gemma2b_forward.1']
    %14 = vsyncpa [#allocation3], 0
    // Predicated region
    $region2: #{gemma2b_forward.1} parent=1 // pred_check
      _
    $region3: #{gemma2b_forward.1} parent=1 // pred_check_branch
      %16 = sbr.rel (0) target = $region5
    $region4: #{gemma2b_forward.1} parent=1 // pred_region
      _
    $region5: #{gemma2b_forward.1} parent=1 // pred_fallthru
      _
    // Predicated region
    $region6: #{gemma2b_forward.1} parent=1 // pred_check
      _
    $region7: #{gemma2b_forward.1} parent=1 // pred_check_branch
      %18 = sbr.rel (0) target = $region9
    $region8: #{gemma2b_forward.1} parent=1 // pred_region
      _
    $region9: #{gemma2b_forward.1} parent=1 // pred_fallthru
      _
    // Predicated region
    $region10: #{gemma2b_forward.1} parent=1 // pred_check
      _
    $region11: #{gemma2b_forward.1} parent=1 // pred_check_branch
      %20 = sbr.rel (0) target = $region13
    $region12: #{gemma2b_forward.1} parent=1 // pred_region
      _
    $region13: #{gemma2b_forward.1} parent=1 // pred_fallthru
      _
    // Predicated region
    $region14: #{gemma2b_forward.1} parent=1 // pred_check
      _
    $region15: #{gemma2b_forward.1} parent=1 // pred_check_branch
      %22 = sbr.rel (0) target = $region17
    $region16: #{gemma2b_forward.1} parent=1 // pred_region
      _
    $region17: #{gemma2b_forward.1} parent=1 // pred_fallthru
      _
    // Predicated region
    $region18: #{gemma2b_forward.1} parent=1 // pred_check
      _
    $region19: #{gemma2b_forward.1} parent=1 // pred_check_branch
      %24 = sbr.rel (0) target = $region21
    $region20: #{gemma2b_forward.1} parent=1 // pred_region
      _
    $region21: #{gemma2b_forward.1} parent=1 // pred_fallthru
      _
    // Predicated region
    $region22: #{gemma2b_forward.1} parent=1 // pred_check
      _
    $region23: #{gemma2b_forward.1} parent=1 // pred_check_branch
      %26 = sbr.rel (0) target = $region25
    $region24: #{gemma2b_forward.1} parent=1 // pred_region
      _
    $region25: #{gemma2b_forward.1} parent=1 // pred_fallthru
      _
    // Predicated region
    $region26: #{gemma2b_forward.1} parent=1 // pred_check
      _
    $region27: #{gemma2b_forward.1} parent=1 // pred_check_branch
      %28 = sbr.rel (0) target = $region29
    $region28: #{gemma2b_forward.1} parent=1 // pred_region
      _
    $region29: #{gemma2b_forward.1} parent=1 // pred_fallthru
      _
    // Predicated region
    $region30: #{gemma2b_forward.1} parent=1 // pred_check
      _
    $region31: #{gemma2b_forward.1} parent=1 // pred_check_branch
      %30 = sbr.rel (0) target = $region33
    $region32: #{gemma2b_forward.1} parent=1 // pred_region
      _
    $region33: #{gemma2b_forward.1} parent=1 // pred_fallthru
      _
    // Predicated region
    $region34: #{gemma2b_forward.1} parent=1 // pred_check
      _
    $region35: #{gemma2b_forward.1} parent=1 // pred_check_branch
      %32 = sbr.rel (0) target = $region37
    $region36: #{gemma2b_forward.1} parent=1 // pred_region
      _
    $region37: #{gemma2b_forward.1} parent=1 // pred_fallthru
      _
    %v34 = vld [vmem:[%s0] sm:$0xff]
    %v35 = vld [vmem:[%s0 + $0x8] sm:$0xff]
    %v36 = vld [vmem:[%s0 + $0x10] sm:$0xff]
    %v37 = vld [vmem:[%s0 + $0x18] sm:$0xff]
    %v38 = vld [vmem:[%s0 + $0x20] sm:$0xff]
    %v39 = vld [vmem:[%s0 + $0x28] sm:$0xff]
    %v40 = vld [vmem:[%s0 + $0x30] sm:$0xff]
    %v41 = vld [vmem:[%s0 + $0x38] sm:$0xff]
    %v42 = vld [vmem:[%s2] sm:$0x3]
    %v43 = vld [vmem:[%s4] sm:$0x1]
    %v44 = vld [vmem:[%s6] sm:$0x3]
    %v45 = vld [vmem:[%s8] sm:$0x3]
    %v46 = vld [vmem:[%s1] sm:$0xff]
    %v47 = vld [vmem:[%s1 + $0x8] sm:$0xff]
    %v48 = vld [vmem:[%s1 + $0x10] sm:$0xff]
    %v49 = vld [vmem:[%s1 + $0x18] sm:$0xff]
    %v50 = vld [vmem:[%s1 + $0x20] sm:$0xff]
    %v51 = vld [vmem:[%s1 + $0x28] sm:$0xff]
    %v52 = vld [vmem:[%s1 + $0x30] sm:$0xff]
    %v53 = vld [vmem:[%s1 + $0x38] sm:$0xff]
    %v54 = vld [vmem:[%s1 + $0x40] sm:$0xff]
    %v55 = vld [vmem:[%s1 + $0x48] sm:$0xff]
    %v56 = vld [vmem:[%s1 + $0x50] sm:$0xff]
    %v57 = vld [vmem:[%s1 + $0x58] sm:$0xff]
    %v58 = vld [vmem:[%s1 + $0x60] sm:$0xff]
    %v59 = vld [vmem:[%s1 + $0x68] sm:$0xff]
    %v60 = vld [vmem:[%s1 + $0x70] sm:$0xff]
    %v61 = vld [vmem:[%s1 + $0x78] sm:$0xff]
    %v62 = vld [vmem:[%s1 + $0x80] sm:$0xff]
    %v63 = vld [vmem:[%s1 + $0x88] sm:$0xff]
    %v64 = vld [vmem:[%s1 + $0x90] sm:$0xff]
    %v65 = vld [vmem:[%s1 + $0x98] sm:$0xff]
    %v66 = vld [vmem:[%s1 + $0xa0] sm:$0xff]
    %v67 = vld [vmem:[%s1 + $0xa8] sm:$0xff]
    %v68 = vld [vmem:[%s1 + $0xb0] sm:$0xff]
    %v69 = vld [vmem:[%s1 + $0xb8] sm:$0xff]
    %v70 = vld [vmem:[%s1 + $0xc0] sm:$0xff]
    %v71 = vld [vmem:[%s1 + $0xc8] sm:$0xff]
    %v72 = vld [vmem:[%s1 + $0xd0] sm:$0xff]
    %v73 = vld [vmem:[%s1 + $0xd8] sm:$0xff]
    %v74 = vld [vmem:[%s1 + $0xe0] sm:$0xff]
    %v75 = vld [vmem:[%s1 + $0xe8] sm:$0xff]
    %v76 = vld [vmem:[%s1 + $0xf0] sm:$0xff]
    %v77 = vld [vmem:[%s1 + $0xf8] sm:$0xff]
    %v79 = vlaneseq
    %v80 = vshrl.u32 %v79, 7
    %v81 = vsub.s32 0, %v80
    %v82 = vrot.slane %v42, %v81
    %v83 = vlaneseq
    %v84 = vshrl.u32 %v83, 7
    %v85 = vsub.s32 1, %v84
    %v86 = vrot.slane %v42, %v85
    %v97 = vunpack.c.l.b16 %v34
    %v98 = vunpack.c.h.b16 %v34
    %v99 = vunpack.c.l.b16 %v35
    %v100 = vunpack.c.h.b16 %v35
    %v101 = vunpack.c.l.b16 %v36
    %v102 = vunpack.c.h.b16 %v36
    %v103 = vunpack.c.l.b16 %v37
    %v104 = vunpack.c.h.b16 %v37
    %v105 = vunpack.c.l.b16 %v38
    %v106 = vunpack.c.h.b16 %v38
    %v107 = vunpack.c.l.b16 %v39
    %v108 = vunpack.c.h.b16 %v39
    %v109 = vunpack.c.l.b16 %v40
    %v110 = vunpack.c.h.b16 %v40
    %v111 = vunpack.c.l.b16 %v41
    %v112 = vunpack.c.h.b16 %v41
    %v113 = vpack.c.b16 %v99, %v97
    %v114 = vpack.c.b16 %v100, %v98
    %v115 = vpack.c.b16 %v103, %v101
    %v116 = vpack.c.b16 %v104, %v102
    %v117 = vpack.c.b16 %v107, %v105
    %v118 = vpack.c.b16 %v108, %v106
    %v119 = vpack.c.b16 %v111, %v109
    %v120 = vpack.c.b16 %v112, %v110
    %v161 = vunpack.c.l.b16 %v46
    %v162 = vunpack.c.h.b16 %v46
    %v163 = vunpack.c.l.b16 %v47
    %v164 = vunpack.c.h.b16 %v47
    %v165 = vunpack.c.l.b16 %v48
    %v166 = vunpack.c.h.b16 %v48
    %v167 = vunpack.c.l.b16 %v49
    %v168 = vunpack.c.h.b16 %v49
    %v169 = vunpack.c.l.b16 %v50
    %v170 = vunpack.c.h.b16 %v50
    %v171 = vunpack.c.l.b16 %v51
    %v172 = vunpack.c.h.b16 %v51
    %v173 = vunpack.c.l.b16 %v52
    %v174 = vunpack.c.h.b16 %v52
    %v175 = vunpack.c.l.b16 %v53
    %v176 = vunpack.c.h.b16 %v53
    %v177 = vunpack.c.l.b16 %v54
    %v178 = vunpack.c.h.b16 %v54
    %v179 = vunpack.c.l.b16 %v55
    %v180 = vunpack.c.h.b16 %v55
    %v181 = vunpack.c.l.b16 %v56
    %v182 = vunpack.c.h.b16 %v56
    %v183 = vunpack.c.l.b16 %v57
    %v184 = vunpack.c.h.b16 %v57
    %v185 = vunpack.c.l.b16 %v58
    %v186 = vunpack.c.h.b16 %v58
    %v187 = vunpack.c.l.b16 %v59
    %v188 = vunpack.c.h.b16 %v59
    %v189 = vunpack.c.l.b16 %v60
    %v190 = vunpack.c.h.b16 %v60
    %v191 = vunpack.c.l.b16 %v61
    %v192 = vunpack.c.h.b16 %v61
    %v193 = vunpack.c.l.b16 %v62
    %v194 = vunpack.c.h.b16 %v62
    %v195 = vunpack.c.l.b16 %v63
    %v196 = vunpack.c.h.b16 %v63
    %v197 = vunpack.c.l.b16 %v64
    %v198 = vunpack.c.h.b16 %v64
    %v199 = vunpack.c.l.b16 %v65
    %v200 = vunpack.c.h.b16 %v65
    %v201 = vunpack.c.l.b16 %v66
    %v202 = vunpack.c.h.b16 %v66
    %v203 = vunpack.c.l.b16 %v67
    %v204 = vunpack.c.h.b16 %v67
    %v205 = vunpack.c.l.b16 %v68
    %v206 = vunpack.c.h.b16 %v68
    %v207 = vunpack.c.l.b16 %v69
    %v208 = vunpack.c.h.b16 %v69
    %v209 = vunpack.c.l.b16 %v70
    %v210 = vunpack.c.h.b16 %v70
    %v211 = vunpack.c.l.b16 %v71
    %v212 = vunpack.c.h.b16 %v71
    %v213 = vunpack.c.l.b16 %v72
    %v214 = vunpack.c.h.b16 %v72
    %v215 = vunpack.c.l.b16 %v73
    %v216 = vunpack.c.h.b16 %v73
    %v217 = vunpack.c.l.b16 %v74
    %v218 = vunpack.c.h.b16 %v74
    %v219 = vunpack.c.l.b16 %v75
    %v220 = vunpack.c.h.b16 %v75
    %v221 = vunpack.c.l.b16 %v76
    %v222 = vunpack.c.h.b16 %v76
    %v223 = vunpack.c.l.b16 %v77
    %v224 = vunpack.c.h.b16 %v77
    %v225 = vpack.c.b16 %v163, %v161
    %v226 = vpack.c.b16 %v164, %v162
    %v227 = vpack.c.b16 %v167, %v165
    %v228 = vpack.c.b16 %v168, %v166
    %v229 = vpack.c.b16 %v171, %v169
    %v230 = vpack.c.b16 %v172, %v170
    %v231 = vpack.c.b16 %v175, %v173
    %v232 = vpack.c.b16 %v176, %v174
    %v233 = vpack.c.b16 %v179, %v177
    %v234 = vpack.c.b16 %v180, %v178
    %v235 = vpack.c.b16 %v183, %v181
    %v236 = vpack.c.b16 %v184, %v182
    %v237 = vpack.c.b16 %v187, %v185
    %v238 = vpack.c.b16 %v188, %v186
    %v239 = vpack.c.b16 %v191, %v189
    %v240 = vpack.c.b16 %v192, %v190
    %v241 = vpack.c.b16 %v195, %v193
    %v242 = vpack.c.b16 %v196, %v194
    %v243 = vpack.c.b16 %v199, %v197
    %v244 = vpack.c.b16 %v200, %v198
    %v245 = vpack.c.b16 %v203, %v201
    %v246 = vpack.c.b16 %v204, %v202
    %v247 = vpack.c.b16 %v207, %v205
    %v248 = vpack.c.b16 %v208, %v206
    %v249 = vpack.c.b16 %v211, %v209
    %v250 = vpack.c.b16 %v212, %v210
    %v251 = vpack.c.b16 %v215, %v213
    %v252 = vpack.c.b16 %v216, %v214
    %v253 = vpack.c.b16 %v219, %v217
    %v254 = vpack.c.b16 %v220, %v218
    %v255 = vpack.c.b16 %v223, %v221
    %v256 = vpack.c.b16 %v224, %v222
    %289 = vmatprep.subr.bf16.mxu0 %v240
    %290 = vmatpush1.bf16.msra.mxu0 %v239
    %291 = vmatprep.subr.bf16.mxu0 %v238
    %292 = vmatpush1.bf16.msra.mxu0 %v237
    %293 = vmatprep.subr.bf16.mxu0 %v236
    %294 = vmatpush1.bf16.msra.mxu0 %v235
    %295 = vmatprep.subr.bf16.mxu0 %v234
    %296 = vmatpush1.bf16.msra.mxu0 %v233
    %297 = vmatprep.subr.bf16.mxu0 %v232
    %298 = vmatpush1.bf16.msra.mxu0 %v231
    %299 = vmatprep.subr.bf16.mxu0 %v230
    %300 = vmatpush1.bf16.msra.mxu0 %v229
    %301 = vmatprep.subr.bf16.mxu0 %v228
    %302 = vmatpush1.bf16.msra.mxu0 %v227
    %303 = vmatprep.subr.bf16.mxu0 %v226
    %304 = vmatpush1.bf16.msra.mxu0 %v225
    %305 = vmatprep.subr.bf16.mxu0 %v256
    %306 = vmatpush2.bf16.msra.mxu0 %v255
    %307 = vmatprep.subr.bf16.mxu0 %v254
    %308 = vmatpush2.bf16.msra.mxu0 %v253
    %309 = vmatprep.subr.bf16.mxu0 %v252
    %310 = vmatpush2.bf16.msra.mxu0 %v251
    %311 = vmatprep.subr.bf16.mxu0 %v250
    %312 = vmatpush2.bf16.msra.mxu0 %v249
    %313 = vmatprep.subr.bf16.mxu0 %v248
    %314 = vmatpush2.bf16.msra.mxu0 %v247
    %315 = vmatprep.subr.bf16.mxu0 %v246
    %316 = vmatpush2.bf16.msra.mxu0 %v245
    %317 = vmatprep.subr.bf16.mxu0 %v244
    %318 = vmatpush2.bf16.msra.mxu0 %v243
    %319 = vmatprep.subr.bf16.mxu0 %v242
    %320 = vmatpush2.bf16.msra.mxu0 %v241
    %321 = vmatprep.mubr.bf16.mxu0 %v114
    %322 = vmatmul.mubr.bf16.gmra.mxu0 %v113
    %v323 = vpop.f32.mrf.mxu0
    %v324 = vadd.f32 %v82, %v323
    %v325 = vpop.f32.mrf.mxu0
    %v326 = vadd.f32 %v86, %v325
    %v327 = vpop.f32.mrf.mxu0
    %v328 = vadd.f32 %v82, %v327
    %v329 = vpop.f32.mrf.mxu0
    %v330 = vadd.f32 %v86, %v329
    %331 = vmatprep.mubr.bf16.mxu0 %v116
    %332 = vmatmul.mubr.bf16.gmra.mxu0 %v115
    %v333 = vpop.f32.mrf.mxu0
    %v334 = vadd.f32 %v82, %v333
    %v335 = vpop.f32.mrf.mxu0
    %v336 = vadd.f32 %v86, %v335
    %v337 = vpop.f32.mrf.mxu0
    %v338 = vadd.f32 %v82, %v337
    %v339 = vpop.f32.mrf.mxu0
    %v340 = vadd.f32 %v86, %v339
    %341 = vmatprep.mubr.bf16.mxu0 %v118
    %342 = vmatmul.mubr.bf16.gmra.mxu0 %v117
    %v343 = vpop.f32.mrf.mxu0
    %v344 = vadd.f32 %v82, %v343
    %v345 = vpop.f32.mrf.mxu0
    %v346 = vadd.f32 %v86, %v345
    %v347 = vpop.f32.mrf.mxu0
    %v348 = vadd.f32 %v82, %v347
    %v349 = vpop.f32.mrf.mxu0
    %v350 = vadd.f32 %v86, %v349
    %351 = vmatprep.mubr.bf16.mxu0 %v120
    %352 = vmatmul.mubr.bf16.gmra.mxu0 %v119
    %v353 = vpop.f32.mrf.mxu0
    %v354 = vadd.f32 %v82, %v353
    %v355 = vpop.f32.mrf.mxu0
    %v356 = vadd.f32 %v86, %v355
    %v357 = vpop.f32.mrf.mxu0
    %v358 = vadd.f32 %v82, %v357
    %v359 = vpop.f32.mrf.mxu0
    %v360 = vadd.f32 %v86, %v359
    %361 = vdwg.mxu0
    %v362 = vmax.f32 %v324, 0.0
    %v363 = vmax.f32 %v326, 0.0
    %v364 = vmax.f32 %v328, 0.0
    %v365 = vmax.f32 %v330, 0.0
    %v366 = vmax.f32 %v334, 0.0
    %v367 = vmax.f32 %v336, 0.0
    %v368 = vmax.f32 %v338, 0.0
    %v369 = vmax.f32 %v340, 0.0
    %v370 = vmax.f32 %v344, 0.0
    %v371 = vmax.f32 %v346, 0.0
    %v372 = vmax.f32 %v348, 0.0
    %v373 = vmax.f32 %v350, 0.0
    %v374 = vmax.f32 %v354, 0.0
    %v375 = vmax.f32 %v356, 0.0
    %v376 = vmax.f32 %v358, 0.0
    %v377 = vmax.f32 %v360, 0.0
    %v378 = vpack.c.bf16 %v364, %v362
    %v379 = vpack.c.bf16 %v365, %v363
    %v380 = vpack.c.bf16 %v368, %v366
    %v381 = vpack.c.bf16 %v369, %v367
    %v382 = vpack.c.bf16 %v372, %v370
    %v383 = vpack.c.bf16 %v373, %v371
    %v384 = vpack.c.bf16 %v376, %v374
    %v385 = vpack.c.bf16 %v377, %v375
    %v386 = vld [vmem:[%s3] sm:$0xf]
    %v387 = vld [vmem:[%s3 + $0x4] sm:$0xf]
    %v388 = vld [vmem:[%s3 + $0x8] sm:$0xf]
    %v389 = vld [vmem:[%s3 + $0xc] sm:$0xf]
    %v390 = vld [vmem:[%s3 + $0x10] sm:$0xf]
    %v391 = vld [vmem:[%s3 + $0x14] sm:$0xf]
    %v392 = vld [vmem:[%s3 + $0x18] sm:$0xf]
    %v393 = vld [vmem:[%s3 + $0x1c] sm:$0xf]
    %v394 = vld [vmem:[%s3 + $0x20] sm:$0xf]
    %v395 = vld [vmem:[%s3 + $0x24] sm:$0xf]
    %v396 = vld [vmem:[%s3 + $0x28] sm:$0xf]
    %v397 = vld [vmem:[%s3 + $0x2c] sm:$0xf]
    %v398 = vld [vmem:[%s3 + $0x30] sm:$0xf]
    %v399 = vld [vmem:[%s3 + $0x34] sm:$0xf]
    %v400 = vld [vmem:[%s3 + $0x38] sm:$0xf]
    %v401 = vld [vmem:[%s3 + $0x3c] sm:$0xf]
    %v402 = vld [vmem:[%s3 + $0x40] sm:$0xf]
    %v403 = vld [vmem:[%s3 + $0x44] sm:$0xf]
    %v404 = vld [vmem:[%s3 + $0x48] sm:$0xf]
    %v405 = vld [vmem:[%s3 + $0x4c] sm:$0xf]
    %v406 = vld [vmem:[%s3 + $0x50] sm:$0xf]
    %v407 = vld [vmem:[%s3 + $0x54] sm:$0xf]
    %v408 = vld [vmem:[%s3 + $0x58] sm:$0xf]
    %v409 = vld [vmem:[%s3 + $0x5c] sm:$0xf]
    %v410 = vld [vmem:[%s3 + $0x60] sm:$0xf]
    %v411 = vld [vmem:[%s3 + $0x64] sm:$0xf]
    %v412 = vld [vmem:[%s3 + $0x68] sm:$0xf]
    %v413 = vld [vmem:[%s3 + $0x6c] sm:$0xf]
    %v414 = vld [vmem:[%s3 + $0x70] sm:$0xf]
    %v415 = vld [vmem:[%s3 + $0x74] sm:$0xf]
    %v416 = vld [vmem:[%s3 + $0x78] sm:$0xf]
    %v417 = vld [vmem:[%s3 + $0x7c] sm:$0xf]
    %v419 = vlaneseq
    %v420 = vshrl.u32 %v419, 7
    %v421 = vsub.s32 0, %v420
    %v422 = vrot.slane %v43, %v421
    %v456 = vunpack.c.l.b16 %v386
    %v457 = vunpack.c.l.b16 %v387
    %v458 = vunpack.c.l.b16 %v388
    %v459 = vunpack.c.l.b16 %v389
    %v460 = vunpack.c.l.b16 %v390
    %v461 = vunpack.c.l.b16 %v391
    %v462 = vunpack.c.l.b16 %v392
    %v463 = vunpack.c.l.b16 %v393
    %v464 = vunpack.c.l.b16 %v394
    %v465 = vunpack.c.l.b16 %v395
    %v466 = vunpack.c.l.b16 %v396
    %v467 = vunpack.c.l.b16 %v397
    %v468 = vunpack.c.l.b16 %v398
    %v469 = vunpack.c.l.b16 %v399
    %v470 = vunpack.c.l.b16 %v400
    %v471 = vunpack.c.l.b16 %v401
    %v472 = vunpack.c.l.b16 %v402
    %v473 = vunpack.c.l.b16 %v403
    %v474 = vunpack.c.l.b16 %v404
    %v475 = vunpack.c.l.b16 %v405
    %v476 = vunpack.c.l.b16 %v406
    %v477 = vunpack.c.l.b16 %v407
    %v478 = vunpack.c.l.b16 %v408
    %v479 = vunpack.c.l.b16 %v409
    %v480 = vunpack.c.l.b16 %v410
    %v481 = vunpack.c.l.b16 %v411
    %v482 = vunpack.c.l.b16 %v412
    %v483 = vunpack.c.l.b16 %v413
    %v484 = vunpack.c.l.b16 %v414
    %v485 = vunpack.c.l.b16 %v415
    %v486 = vunpack.c.l.b16 %v416
    %v487 = vunpack.c.l.b16 %v417
    %v488 = vpack.c.b16 %v457, %v456
    %v489 = vpack.c.b16 %v459, %v458
    %v490 = vpack.c.b16 %v461, %v460
    %v491 = vpack.c.b16 %v463, %v462
    %v492 = vpack.c.b16 %v465, %v464
    %v493 = vpack.c.b16 %v467, %v466
    %v494 = vpack.c.b16 %v469, %v468
    %v495 = vpack.c.b16 %v471, %v470
    %v496 = vpack.c.b16 %v473, %v472
    %v497 = vpack.c.b16 %v475, %v474
    %v498 = vpack.c.b16 %v477, %v476
    %v499 = vpack.c.b16 %v479, %v478
    %v500 = vpack.c.b16 %v481, %v480
    %v501 = vpack.c.b16 %v483, %v482
    %v502 = vpack.c.b16 %v485, %v484
    %v503 = vpack.c.b16 %v487, %v486
    %520 = vmatprep.subr.bf16.mxu0 0
    %521 = vmatpush1.bf16.msra.mxu0 %v495
    %522 = vmatprep.subr.bf16.mxu0 0
    %523 = vmatpush1.bf16.msra.mxu0 %v494
    %524 = vmatprep.subr.bf16.mxu0 0
    %525 = vmatpush1.bf16.msra.mxu0 %v493
    %526 = vmatprep.subr.bf16.mxu0 0
    %527 = vmatpush1.bf16.msra.mxu0 %v492
    %528 = vmatprep.subr.bf16.mxu0 0
    %529 = vmatpush1.bf16.msra.mxu0 %v491
    %530 = vmatprep.subr.bf16.mxu0 0
    %531 = vmatpush1.bf16.msra.mxu0 %v490
    %532 = vmatprep.subr.bf16.mxu0 0
    %533 = vmatpush1.bf16.msra.mxu0 %v489
    %534 = vmatprep.subr.bf16.mxu0 0
    %535 = vmatpush1.bf16.msra.mxu0 %v488
    %536 = vmatprep.subr.bf16.mxu0 0
    %537 = vmatpush2.bf16.msra.mxu0 %v503
    %538 = vmatprep.subr.bf16.mxu0 0
    %539 = vmatpush2.bf16.msra.mxu0 %v502
    %540 = vmatprep.subr.bf16.mxu0 0
    %541 = vmatpush2.bf16.msra.mxu0 %v501
    %542 = vmatprep.subr.bf16.mxu0 0
    %543 = vmatpush2.bf16.msra.mxu0 %v500
    %544 = vmatprep.subr.bf16.mxu0 0
    %545 = vmatpush2.bf16.msra.mxu0 %v499
    %546 = vmatprep.subr.bf16.mxu0 0
    %547 = vmatpush2.bf16.msra.mxu0 %v498
    %548 = vmatprep.subr.bf16.mxu0 0
    %549 = vmatpush2.bf16.msra.mxu0 %v497
    %550 = vmatprep.subr.bf16.mxu0 0
    %551 = vmatpush2.bf16.msra.mxu0 %v496
    %552 = vmatprep.mubr.bf16.mxu0 %v379
    %553 = vmatmul.mubr.bf16.gmra.mxu0 %v378
    %v554 = vpop.f32.mrf.mxu0
    %v555 = vadd.f32 %v422, %v554
    %v556 = vpop.f32.mrf.mxu0
    %v557 = vpop.f32.mrf.mxu0
    %v558 = vadd.f32 %v422, %v557
    %v559 = vpop.f32.mrf.mxu0
    %560 = vmatprep.mubr.bf16.mxu0 %v381
    %561 = vmatmul.mubr.bf16.gmra.mxu0 %v380
    %v562 = vpop.f32.mrf.mxu0
    %v563 = vadd.f32 %v422, %v562
    %v564 = vpop.f32.mrf.mxu0
    %v565 = vpop.f32.mrf.mxu0
    %v566 = vadd.f32 %v422, %v565
    %v567 = vpop.f32.mrf.mxu0
    %568 = vmatprep.mubr.bf16.mxu0 %v383
    %569 = vmatmul.mubr.bf16.gmra.mxu0 %v382
    %v570 = vpop.f32.mrf.mxu0
    %v571 = vadd.f32 %v422, %v570
    %v572 = vpop.f32.mrf.mxu0
    %v573 = vpop.f32.mrf.mxu0
    %v574 = vadd.f32 %v422, %v573
    %v575 = vpop.f32.mrf.mxu0
    %576 = vmatprep.mubr.bf16.mxu0 %v385
    %577 = vmatmul.mubr.bf16.gmra.mxu0 %v384
    %v578 = vpop.f32.mrf.mxu0
    %v579 = vadd.f32 %v422, %v578
    %v580 = vpop.f32.mrf.mxu0
    %v581 = vpop.f32.mrf.mxu0
    %v582 = vadd.f32 %v422, %v581
    %v583 = vpop.f32.mrf.mxu0
    %584 = vdwg.mxu0
    %v585 = vpack.c.bf16 %v558, %v555
    %v586 = vpack.c.bf16 %v566, %v563
    %v587 = vpack.c.bf16 %v574, %v571
    %v588 = vpack.c.bf16 %v582, %v579
    %v589 = vld [vmem:[%s5] sm:$0xff]
    %v590 = vld [vmem:[%s5 + $0x8] sm:$0xff]
    %v591 = vld [vmem:[%s5 + $0x10] sm:$0xff]
    %v592 = vld [vmem:[%s5 + $0x18] sm:$0xff]
    %v593 = vld [vmem:[%s5 + $0x20] sm:$0xff]
    %v594 = vld [vmem:[%s5 + $0x28] sm:$0xff]
    %v595 = vld [vmem:[%s5 + $0x30] sm:$0xff]
    %v596 = vld [vmem:[%s5 + $0x38] sm:$0xff]
    %v597 = vld [vmem:[%s5 + $0x40] sm:$0xff]
    %v598 = vld [vmem:[%s5 + $0x48] sm:$0xff]
    %v599 = vld [vmem:[%s5 + $0x50] sm:$0xff]
    %v600 = vld [vmem:[%s5 + $0x58] sm:$0xff]
    %v601 = vld [vmem:[%s5 + $0x60] sm:$0xff]
    %v602 = vld [vmem:[%s5 + $0x68] sm:$0xff]
    %v603 = vld [vmem:[%s5 + $0x70] sm:$0xff]
    %v604 = vld [vmem:[%s5 + $0x78] sm:$0xff]
    %v606 = vlaneseq
    %v607 = vshrl.u32 %v606, 7
    %v608 = vsub.s32 0, %v607
    %v609 = vrot.slane %v44, %v608
    %v610 = vlaneseq
    %v611 = vshrl.u32 %v610, 7
    %v612 = vsub.s32 1, %v611
    %v613 = vrot.slane %v44, %v612
    %v632 = vunpack.c.l.b16 %v589
    %v633 = vunpack.c.h.b16 %v589
    %v634 = vunpack.c.l.b16 %v590
    %v635 = vunpack.c.h.b16 %v590
    %v636 = vunpack.c.l.b16 %v591
    %v637 = vunpack.c.h.b16 %v591
    %v638 = vunpack.c.l.b16 %v592
    %v639 = vunpack.c.h.b16 %v592
    %v640 = vunpack.c.l.b16 %v593
    %v641 = vunpack.c.h.b16 %v593
    %v642 = vunpack.c.l.b16 %v594
    %v643 = vunpack.c.h.b16 %v594
    %v644 = vunpack.c.l.b16 %v595
    %v645 = vunpack.c.h.b16 %v595
    %v646 = vunpack.c.l.b16 %v596
    %v647 = vunpack.c.h.b16 %v596
    %v648 = vunpack.c.l.b16 %v597
    %v649 = vunpack.c.h.b16 %v597
    %v650 = vunpack.c.l.b16 %v598
    %v651 = vunpack.c.h.b16 %v598
    %v652 = vunpack.c.l.b16 %v599
    %v653 = vunpack.c.h.b16 %v599
    %v654 = vunpack.c.l.b16 %v600
    %v655 = vunpack.c.h.b16 %v600
    %v656 = vunpack.c.l.b16 %v601
    %v657 = vunpack.c.h.b16 %v601
    %v658 = vunpack.c.l.b16 %v602
    %v659 = vunpack.c.h.b16 %v602
    %v660 = vunpack.c.l.b16 %v603
    %v661 = vunpack.c.h.b16 %v603
    %v662 = vunpack.c.l.b16 %v604
    %v663 = vunpack.c.h.b16 %v604
    %v664 = vpack.c.b16 %v634, %v632
    %v665 = vpack.c.b16 %v635, %v633
    %v666 = vpack.c.b16 %v638, %v636
    %v667 = vpack.c.b16 %v639, %v637
    %v668 = vpack.c.b16 %v642, %v640
    %v669 = vpack.c.b16 %v643, %v641
    %v670 = vpack.c.b16 %v646, %v644
    %v671 = vpack.c.b16 %v647, %v645
    %v672 = vpack.c.b16 %v650, %v648
    %v673 = vpack.c.b16 %v651, %v649
    %v674 = vpack.c.b16 %v654, %v652
    %v675 = vpack.c.b16 %v655, %v653
    %v676 = vpack.c.b16 %v658, %v656
    %v677 = vpack.c.b16 %v659, %v657
    %v678 = vpack.c.b16 %v662, %v660
    %v679 = vpack.c.b16 %v663, %v661
    %696 = vmatprep.subr.bf16.mxu0 %v679
    %697 = vmatpush1.bf16.msra.mxu0 %v678
    %698 = vmatprep.subr.bf16.mxu0 %v677
    %699 = vmatpush1.bf16.msra.mxu0 %v676
    %700 = vmatprep.subr.bf16.mxu0 %v675
    %701 = vmatpush1.bf16.msra.mxu0 %v674
    %702 = vmatprep.subr.bf16.mxu0 %v673
    %703 = vmatpush1.bf16.msra.mxu0 %v672
    %704 = vmatprep.subr.bf16.mxu0 %v671
    %705 = vmatpush1.bf16.msra.mxu0 %v670
    %706 = vmatprep.subr.bf16.mxu0 %v669
    %707 = vmatpush1.bf16.msra.mxu0 %v668
    %708 = vmatprep.subr.bf16.mxu0 %v667
    %709 = vmatpush1.bf16.msra.mxu0 %v666
    %710 = vmatprep.subr.bf16.mxu0 %v665
    %711 = vmatpush1.bf16.msra.mxu0 %v664
    %712 = vmatprep.subr.bf16.mxu0 0
    %713 = vmatpush2.bf16.msra.mxu0 0
    %714 = vmatprep.subr.bf16.mxu0 0
    %715 = vmatpush2.bf16.msra.mxu0 0
    %716 = vmatprep.subr.bf16.mxu0 0
    %717 = vmatpush2.bf16.msra.mxu0 0
    %718 = vmatprep.subr.bf16.mxu0 0
    %719 = vmatpush2.bf16.msra.mxu0 0
    %720 = vmatprep.subr.bf16.mxu0 0
    %721 = vmatpush2.bf16.msra.mxu0 0
    %722 = vmatprep.subr.bf16.mxu0 0
    %723 = vmatpush2.bf16.msra.mxu0 0
    %724 = vmatprep.subr.bf16.mxu0 0
    %725 = vmatpush2.bf16.msra.mxu0 0
    %726 = vmatprep.subr.bf16.mxu0 0
    %727 = vmatpush2.bf16.msra.mxu0 0
    %728 = vmatprep.mubr.bf16.mxu0 0
    %729 = vmatmul.mubr.bf16.gmra.mxu0 %v585
    %v730 = vpop.f32.mrf.mxu0
    %v731 = vadd.f32 %v609, %v730
    %v732 = vpop.f32.mrf.mxu0
    %v733 = vadd.f32 %v613, %v732
    %v734 = vpop.f32.mrf.mxu0
    %v735 = vadd.f32 %v609, %v734
    %v736 = vpop.f32.mrf.mxu0
    %v737 = vadd.f32 %v613, %v736
    %738 = vmatprep.mubr.bf16.mxu0 0
    %739 = vmatmul.mubr.bf16.gmra.mxu0 %v586
    %v740 = vpop.f32.mrf.mxu0
    %v741 = vadd.f32 %v609, %v740
    %v742 = vpop.f32.mrf.mxu0
    %v743 = vadd.f32 %v613, %v742
    %v744 = vpop.f32.mrf.mxu0
    %v745 = vadd.f32 %v609, %v744
    %v746 = vpop.f32.mrf.mxu0
    %v747 = vadd.f32 %v613, %v746
    %748 = vmatprep.mubr.bf16.mxu0 0
    %749 = vmatmul.mubr.bf16.gmra.mxu0 %v587
    %v750 = vpop.f32.mrf.mxu0
    %v751 = vadd.f32 %v609, %v750
    %v752 = vpop.f32.mrf.mxu0
    %v753 = vadd.f32 %v613, %v752
    %v754 = vpop.f32.mrf.mxu0
    %v755 = vadd.f32 %v609, %v754
    %v756 = vpop.f32.mrf.mxu0
    %v757 = vadd.f32 %v613, %v756
    %758 = vmatprep.mubr.bf16.mxu0 0
    %759 = vmatmul.mubr.bf16.gmra.mxu0 %v588
    %v760 = vpop.f32.mrf.mxu0
    %v761 = vadd.f32 %v609, %v760
    %v762 = vpop.f32.mrf.mxu0
    %v763 = vadd.f32 %v613, %v762
    %v764 = vpop.f32.mrf.mxu0
    %v765 = vadd.f32 %v609, %v764
    %v766 = vpop.f32.mrf.mxu0
    %v767 = vadd.f32 %v613, %v766
    %768 = vdwg.mxu0
    %v769 = vmax.f32 %v731, 0.0
    %v770 = vmax.f32 %v733, 0.0
    %v771 = vmax.f32 %v735, 0.0
    %v772 = vmax.f32 %v737, 0.0
    %v773 = vmax.f32 %v741, 0.0
    %v774 = vmax.f32 %v743, 0.0
    %v775 = vmax.f32 %v745, 0.0
    %v776 = vmax.f32 %v747, 0.0
    %v777 = vmax.f32 %v751, 0.0
    %v778 = vmax.f32 %v753, 0.0
    %v779 = vmax.f32 %v755, 0.0
    %v780 = vmax.f32 %v757, 0.0
    %v781 = vmax.f32 %v761, 0.0
    %v782 = vmax.f32 %v763, 0.0
    %v783 = vmax.f32 %v765, 0.0
    %v784 = vmax.f32 %v767, 0.0
    %v785 = vpack.c.bf16 %v771, %v769
    %v786 = vpack.c.bf16 %v772, %v770
    %v787 = vpack.c.bf16 %v775, %v773
    %v788 = vpack.c.bf16 %v776, %v774
    %v789 = vpack.c.bf16 %v779, %v777
    %v790 = vpack.c.bf16 %v780, %v778
    %v791 = vpack.c.bf16 %v783, %v781
    %v792 = vpack.c.bf16 %v784, %v782
    %v793 = vld [vmem:[%s7] sm:$0xff]
    %v794 = vld [vmem:[%s7 + $0x8] sm:$0xff]
    %v795 = vld [vmem:[%s7 + $0x10] sm:$0xff]
    %v796 = vld [vmem:[%s7 + $0x18] sm:$0xff]
    %v797 = vld [vmem:[%s7 + $0x20] sm:$0xff]
    %v798 = vld [vmem:[%s7 + $0x28] sm:$0xff]
    %v799 = vld [vmem:[%s7 + $0x30] sm:$0xff]
    %v800 = vld [vmem:[%s7 + $0x38] sm:$0xff]
    %v801 = vld [vmem:[%s7 + $0x40] sm:$0xff]
    %v802 = vld [vmem:[%s7 + $0x48] sm:$0xff]
    %v803 = vld [vmem:[%s7 + $0x50] sm:$0xff]
    %v804 = vld [vmem:[%s7 + $0x58] sm:$0xff]
    %v805 = vld [vmem:[%s7 + $0x60] sm:$0xff]
    %v806 = vld [vmem:[%s7 + $0x68] sm:$0xff]
    %v807 = vld [vmem:[%s7 + $0x70] sm:$0xff]
    %v808 = vld [vmem:[%s7 + $0x78] sm:$0xff]
    %v809 = vld [vmem:[%s7 + $0x80] sm:$0xff]
    %v810 = vld [vmem:[%s7 + $0x88] sm:$0xff]
    %v811 = vld [vmem:[%s7 + $0x90] sm:$0xff]
    %v812 = vld [vmem:[%s7 + $0x98] sm:$0xff]
    %v813 = vld [vmem:[%s7 + $0xa0] sm:$0xff]
    %v814 = vld [vmem:[%s7 + $0xa8] sm:$0xff]
    %v815 = vld [vmem:[%s7 + $0xb0] sm:$0xff]
    %v816 = vld [vmem:[%s7 + $0xb8] sm:$0xff]
    %v817 = vld [vmem:[%s7 + $0xc0] sm:$0xff]
    %v818 = vld [vmem:[%s7 + $0xc8] sm:$0xff]
    %v819 = vld [vmem:[%s7 + $0xd0] sm:$0xff]
    %v820 = vld [vmem:[%s7 + $0xd8] sm:$0xff]
    %v821 = vld [vmem:[%s7 + $0xe0] sm:$0xff]
    %v822 = vld [vmem:[%s7 + $0xe8] sm:$0xff]
    %v823 = vld [vmem:[%s7 + $0xf0] sm:$0xff]
    %v824 = vld [vmem:[%s7 + $0xf8] sm:$0xff]
    %v826 = vlaneseq
    %v827 = vshrl.u32 %v826, 7
    %v828 = vsub.s32 0, %v827
    %v829 = vrot.slane %v45, %v828
    %v830 = vlaneseq
    %v831 = vshrl.u32 %v830, 7
    %v832 = vsub.s32 1, %v831
    %v833 = vrot.slane %v45, %v832
    %v868 = vunpack.c.l.b16 %v793
    %v869 = vunpack.c.h.b16 %v793
    %v870 = vunpack.c.l.b16 %v794
    %v871 = vunpack.c.h.b16 %v794
    %v872 = vunpack.c.l.b16 %v795
    %v873 = vunpack.c.h.b16 %v795
    %v874 = vunpack.c.l.b16 %v796
    %v875 = vunpack.c.h.b16 %v796
    %v876 = vunpack.c.l.b16 %v797
    %v877 = vunpack.c.h.b16 %v797
    %v878 = vunpack.c.l.b16 %v798
    %v879 = vunpack.c.h.b16 %v798
    %v880 = vunpack.c.l.b16 %v799
    %v881 = vunpack.c.h.b16 %v799
    %v882 = vunpack.c.l.b16 %v800
    %v883 = vunpack.c.h.b16 %v800
    %v884 = vunpack.c.l.b16 %v801
    %v885 = vunpack.c.h.b16 %v801
    %v886 = vunpack.c.l.b16 %v802
    %v887 = vunpack.c.h.b16 %v802
    %v888 = vunpack.c.l.b16 %v803
    %v889 = vunpack.c.h.b16 %v803
    %v890 = vunpack.c.l.b16 %v804
    %v891 = vunpack.c.h.b16 %v804
    %v892 = vunpack.c.l.b16 %v805
    %v893 = vunpack.c.h.b16 %v805
    %v894 = vunpack.c.l.b16 %v806
    %v895 = vunpack.c.h.b16 %v806
    %v896 = vunpack.c.l.b16 %v807
    %v897 = vunpack.c.h.b16 %v807
    %v898 = vunpack.c.l.b16 %v808
    %v899 = vunpack.c.h.b16 %v808
    %v900 = vunpack.c.l.b16 %v809
    %v901 = vunpack.c.h.b16 %v809
    %v902 = vunpack.c.l.b16 %v810
    %v903 = vunpack.c.h.b16 %v810
    %v904 = vunpack.c.l.b16 %v811
    %v905 = vunpack.c.h.b16 %v811
    %v906 = vunpack.c.l.b16 %v812
    %v907 = vunpack.c.h.b16 %v812
    %v908 = vunpack.c.l.b16 %v813
    %v909 = vunpack.c.h.b16 %v813
    %v910 = vunpack.c.l.b16 %v814
    %v911 = vunpack.c.h.b16 %v814
    %v912 = vunpack.c.l.b16 %v815
    %v913 = vunpack.c.h.b16 %v815
    %v914 = vunpack.c.l.b16 %v816
    %v915 = vunpack.c.h.b16 %v816
    %v916 = vunpack.c.l.b16 %v817
    %v917 = vunpack.c.h.b16 %v817
    %v918 = vunpack.c.l.b16 %v818
    %v919 = vunpack.c.h.b16 %v818
    %v920 = vunpack.c.l.b16 %v819
    %v921 = vunpack.c.h.b16 %v819
    %v922 = vunpack.c.l.b16 %v820
    %v923 = vunpack.c.h.b16 %v820
    %v924 = vunpack.c.l.b16 %v821
    %v925 = vunpack.c.h.b16 %v821
    %v926 = vunpack.c.l.b16 %v822
    %v927 = vunpack.c.h.b16 %v822
    %v928 = vunpack.c.l.b16 %v823
    %v929 = vunpack.c.h.b16 %v823
    %v930 = vunpack.c.l.b16 %v824
    %v931 = vunpack.c.h.b16 %v824
    %v932 = vpack.c.b16 %v870, %v868
    %v933 = vpack.c.b16 %v871, %v869
    %v934 = vpack.c.b16 %v874, %v872
    %v935 = vpack.c.b16 %v875, %v873
    %v936 = vpack.c.b16 %v878, %v876
    %v937 = vpack.c.b16 %v879, %v877
    %v938 = vpack.c.b16 %v882, %v880
    %v939 = vpack.c.b16 %v883, %v881
    %v940 = vpack.c.b16 %v886, %v884
    %v941 = vpack.c.b16 %v887, %v885
    %v942 = vpack.c.b16 %v890, %v888
    %v943 = vpack.c.b16 %v891, %v889
    %v944 = vpack.c.b16 %v894, %v892
    %v945 = vpack.c.b16 %v895, %v893
    %v946 = vpack.c.b16 %v898, %v896
    %v947 = vpack.c.b16 %v899, %v897
    %v948 = vpack.c.b16 %v902, %v900
    %v949 = vpack.c.b16 %v903, %v901
    %v950 = vpack.c.b16 %v906, %v904
    %v951 = vpack.c.b16 %v907, %v905
    %v952 = vpack.c.b16 %v910, %v908
    %v953 = vpack.c.b16 %v911, %v909
    %v954 = vpack.c.b16 %v914, %v912
    %v955 = vpack.c.b16 %v915, %v913
    %v956 = vpack.c.b16 %v918, %v916
    %v957 = vpack.c.b16 %v919, %v917
    %v958 = vpack.c.b16 %v922, %v920
    %v959 = vpack.c.b16 %v923, %v921
    %v960 = vpack.c.b16 %v926, %v924
    %v961 = vpack.c.b16 %v927, %v925
    %v962 = vpack.c.b16 %v930, %v928
    %v963 = vpack.c.b16 %v931, %v929
    %996 = vmatprep.subr.bf16.mxu0 %v947
    %997 = vmatpush1.bf16.msra.mxu0 %v946
    %998 = vmatprep.subr.bf16.mxu0 %v945
    %999 = vmatpush1.bf16.msra.mxu0 %v944
    %1000 = vmatprep.subr.bf16.mxu0 %v943
    %1001 = vmatpush1.bf16.msra.mxu0 %v942
    %1002 = vmatprep.subr.bf16.mxu0 %v941
    %1003 = vmatpush1.bf16.msra.mxu0 %v940
    %1004 = vmatprep.subr.bf16.mxu0 %v939
    %1005 = vmatpush1.bf16.msra.mxu0 %v938
    %1006 = vmatprep.subr.bf16.mxu0 %v937
    %1007 = vmatpush1.bf16.msra.mxu0 %v936
    %1008 = vmatprep.subr.bf16.mxu0 %v935
    %1009 = vmatpush1.bf16.msra.mxu0 %v934
    %1010 = vmatprep.subr.bf16.mxu0 %v933
    %1011 = vmatpush1.bf16.msra.mxu0 %v932
    %1012 = vmatprep.subr.bf16.mxu0 %v963
    %1013 = vmatpush2.bf16.msra.mxu0 %v962
    %1014 = vmatprep.subr.bf16.mxu0 %v961
    %1015 = vmatpush2.bf16.msra.mxu0 %v960
    %1016 = vmatprep.subr.bf16.mxu0 %v959
    %1017 = vmatpush2.bf16.msra.mxu0 %v958
    %1018 = vmatprep.subr.bf16.mxu0 %v957
    %1019 = vmatpush2.bf16.msra.mxu0 %v956
    %1020 = vmatprep.subr.bf16.mxu0 %v955
    %1021 = vmatpush2.bf16.msra.mxu0 %v954
    %1022 = vmatprep.subr.bf16.mxu0 %v953
    %1023 = vmatpush2.bf16.msra.mxu0 %v952
    %1024 = vmatprep.subr.bf16.mxu0 %v951
    %1025 = vmatpush2.bf16.msra.mxu0 %v950
    %1026 = vmatprep.subr.bf16.mxu0 %v949
    %1027 = vmatpush2.bf16.msra.mxu0 %v948
    %1028 = vmatprep.mubr.bf16.mxu0 %v786
    %1029 = vmatmul.mubr.bf16.gmra.mxu0 %v785
    %v1030 = vpop.f32.mrf.mxu0
    %v1031 = vadd.f32 %v829, %v1030
    %v1032 = vpop.f32.mrf.mxu0
    %v1033 = vadd.f32 %v833, %v1032
    %v1034 = vpop.f32.mrf.mxu0
    %v1035 = vadd.f32 %v829, %v1034
    %v1036 = vpop.f32.mrf.mxu0
    %v1037 = vadd.f32 %v833, %v1036
    %1038 = vmatprep.mubr.bf16.mxu0 %v788
    %1039 = vmatmul.mubr.bf16.gmra.mxu0 %v787
    %v1040 = vpop.f32.mrf.mxu0
    %v1041 = vadd.f32 %v829, %v1040
    %v1042 = vpop.f32.mrf.mxu0
    %v1043 = vadd.f32 %v833, %v1042
    %v1044 = vpop.f32.mrf.mxu0
    %v1045 = vadd.f32 %v829, %v1044
    %v1046 = vpop.f32.mrf.mxu0
    %v1047 = vadd.f32 %v833, %v1046
    %1048 = vmatprep.mubr.bf16.mxu0 %v790
    %1049 = vmatmul.mubr.bf16.gmra.mxu0 %v789
    %v1050 = vpop.f32.mrf.mxu0
    %v1051 = vadd.f32 %v829, %v1050
    %v1052 = vpop.f32.mrf.mxu0
    %v1053 = vadd.f32 %v833, %v1052
    %v1054 = vpop.f32.mrf.mxu0
    %v1055 = vadd.f32 %v829, %v1054
    %v1056 = vpop.f32.mrf.mxu0
    %v1057 = vadd.f32 %v833, %v1056
    %1058 = vmatprep.mubr.bf16.mxu0 %v792
    %1059 = vmatmul.mubr.bf16.gmra.mxu0 %v791
    %v1060 = vpop.f32.mrf.mxu0
    %v1061 = vadd.f32 %v829, %v1060
    %v1062 = vpop.f32.mrf.mxu0
    %v1063 = vadd.f32 %v833, %v1062
    %v1064 = vpop.f32.mrf.mxu0
    %v1065 = vadd.f32 %v829, %v1064
    %v1066 = vpop.f32.mrf.mxu0
    %v1067 = vadd.f32 %v833, %v1066
    %1068 = vdwg.mxu0
    %1069 = vst [vmem:[#allocation2] sm:$0xff] %v1031
    %1070 = vst [vmem:[#allocation2 + $0x8] sm:$0xff] %v1033
    %1071 = vst [vmem:[#allocation2 + $0x10] sm:$0xff] %v1035
    %1072 = vst [vmem:[#allocation2 + $0x18] sm:$0xff] %v1037
    %1073 = vst [vmem:[#allocation2 + $0x20] sm:$0xff] %v1041
    %1074 = vst [vmem:[#allocation2 + $0x28] sm:$0xff] %v1043
    %1075 = vst [vmem:[#allocation2 + $0x30] sm:$0xff] %v1045
    %1076 = vst [vmem:[#allocation2 + $0x38] sm:$0xff] %v1047
    %1077 = vst [vmem:[#allocation2 + $0x40] sm:$0xff] %v1051
    %1078 = vst [vmem:[#allocation2 + $0x48] sm:$0xff] %v1053
    %1079 = vst [vmem:[#allocation2 + $0x50] sm:$0xff] %v1055
    %1080 = vst [vmem:[#allocation2 + $0x58] sm:$0xff] %v1057
    %1081 = vst [vmem:[#allocation2 + $0x60] sm:$0xff] %v1061
    %1082 = vst [vmem:[#allocation2 + $0x68] sm:$0xff] %v1063
    %1083 = vst [vmem:[#allocation2 + $0x70] sm:$0xff] %v1065
    %1084 = vst [vmem:[#allocation2 + $0x78] sm:$0xff] %v1067
    // Predicated region
    $region38: #{gemma2b_forward.1} parent=1 // pred_check
      _
    $region39: #{gemma2b_forward.1} parent=1 // pred_check_branch
      %1086 = sbr.rel (0) target = $region41
    $region40: #{gemma2b_forward.1} parent=1 // pred_region
      %s1088 = ssub.s32 2048, 2048
      %1089 = vsyncadd [#allocation3], %s1088
      %s1090 = sshll.u32 [#allocation2], 4
      %s1091 = int_to_ptr.vmem [resolvable:$true] %s1090
      %1096 = dma.vmem_to_hbm [thread:$0]  %s1091, 2048, %s9, [#allocation3], 256, 256, 16
    $region41: #{gemma2b_forward.1} parent=1 // pred_fallthru
      _
    // Predicated region
    $region42: #{gemma2b_forward.1} parent=1 // pred_check
      _
    $region43: #{gemma2b_forward.1} parent=1 // pred_check_branch
      %1098 = sbr.rel (0) target = $region45
    $region44: #{gemma2b_forward.1} parent=1 // pred_region
      %1099 = dma.done [#allocation3], 2048
    $region45: #{gemma2b_forward.1} parent=1 // pred_fallthru
      _
    %1100 = vsyncpa [#allocation3], 1

</llo_original>
